<compile_context>
chip_gen: v7x
topology: tpu7x:2x2x1
jax: 0.10.0
libtpu: 0.0.40
codegen_flags: <defaults>
</compile_context>

<pallas_src>
import functools

import jax
import jax.numpy as jnp
from jax.experimental import pallas as pl
from jax.experimental.pallas import tpu as pltpu


def _label_smoothing_kernel(pred_ref, tgt_ref, out_ref, *, confidence, off_value,
                            num_classes, batch_size, block_rows):
    i = pl.program_id(0)

    x = pred_ref[...].astype(jnp.float32)          # (TB, C), f32 math in-kernel
    tgt = tgt_ref[...]                             # (TB, 1) int32

    # Numerically stable log-softmax statistics (no full logp materialization).
    m = jnp.max(x, axis=-1, keepdims=True)         # (TB, 1)
    shifted = x - m                                # (TB, C)
    lse = jnp.log(jnp.sum(jnp.exp(shifted), axis=-1, keepdims=True))  # (TB, 1)

    # Fold the smoothed distribution algebraically:
    #   sum_c logp      = sum_c shifted - C * lse
    #   logp[target]    = shifted[target] - lse
    col = jax.lax.broadcasted_iota(jnp.int32, shifted.shape, dimension=1)
    sum_shifted = jnp.sum(shifted, axis=-1, keepdims=True)                    # (TB, 1)
    tgt_shifted = jnp.sum(jnp.where(col == tgt, shifted, 0.0),
                          axis=-1, keepdims=True)                             # (TB, 1)

    sum_logp = sum_shifted - jnp.float32(num_classes) * lse
    logp_tgt = tgt_shifted - lse

    per_row = (-jnp.float32(off_value) * sum_logp
               - jnp.float32(confidence - off_value) * logp_tgt)              # (TB, 1)

    # Mask out padded rows of the ragged last tile (select, not multiply, so
    # garbage/NaN in padded rows cannot leak into the sum).
    row = jax.lax.broadcasted_iota(jnp.int32, per_row.shape, dimension=0) + i * block_rows
    per_row = jnp.where(row < batch_size, per_row, 0.0)

    partial = jnp.sum(per_row)                     # scalar partial sum for this tile
    # Lane-dense (1, 128) write: full-width unmasked store into this tile's slot.
    out_ref[...] = jnp.full(out_ref.shape, partial, dtype=jnp.float32)


def label_smoothing_loss(pred, target, *, num_classes, smoothing=0.5, block_rows=512):
    """pred: [B, C] float32/bf16 logits, target: [B] int class ids -> scalar loss."""
    B, C = pred.shape
    assert C == num_classes
    confidence = 1.0 - smoothing
    off_value = smoothing / (num_classes - 1)

    # Tile the batch: block second-to-last dim must be a multiple of 8 (sublane)
    # unless it spans the full batch.
    if block_rows >= B:
        TB = B
    else:
        TB = max(8, (block_rows // 8) * 8)
    num_tiles = (B + TB - 1) // TB

    kernel = functools.partial(
        _label_smoothing_kernel,
        confidence=confidence,
        off_value=off_value,
        num_classes=C,
        batch_size=B,
        block_rows=TB,
    )

    target_2d = target.astype(jnp.int32).reshape(B, 1)

    # Explicit VMEM budget: double-buffered pred/target tiles + output slot,
    # clamped to stay valid on v5e (16 MiB scoped default) and v7x (64 MiB phys).
    tile_bytes = TB * C * pred.dtype.itemsize + TB * 4 + 128 * 4
    vmem_limit = min(64 << 20, max(16 << 20, 2 * tile_bytes + (2 << 20)))

    out = pl.pallas_call(
        kernel,
        out_shape=jax.ShapeDtypeStruct((1, num_tiles * 128), jnp.float32),
        grid=(num_tiles,),
        in_specs=[
            pl.BlockSpec((TB, C), lambda i: (i, 0)),   # pred tile, native dtype
            pl.BlockSpec((TB, 1), lambda i: (i, 0)),   # target tile
        ],
        out_specs=pl.BlockSpec((1, 128), lambda i: (0, i)),
        compiler_params=pltpu.CompilerParams(
            dimension_semantics=("parallel",),
            vmem_limit_bytes=int(vmem_limit),
        ),
    )(pred, target_2d)

    # Per-tile partials live in lane 0 of each 128-lane slot.
    partials = out.reshape(num_tiles, 128)[:, 0]
    return jnp.sum(partials) / B


def _reference_loss(pred, target, *, num_classes, smoothing=0.5):
    """Pure-JAX reference matching the PyTorch module exactly."""
    confidence = 1.0 - smoothing
    logp = jax.nn.log_softmax(pred.astype(jnp.float32), axis=-1)
    true_dist = jnp.full_like(logp, smoothing / (num_classes - 1))
    true_dist = true_dist.at[jnp.arange(pred.shape[0]), target].set(confidence)
    return jnp.mean(jnp.sum(-true_dist * logp, axis=-1))


if __name__ == "__main__":
    key = jax.random.PRNGKey(0)
    B, C = 40, 128          # small batch, num_classes=128 (lane-aligned)
    smoothing = 0.5

    k1, k2 = jax.random.split(key)
    pred = jax.random.normal(k1, (B, C), dtype=jnp.float32)
    target = jax.random.randint(k2, (B,), 0, C, dtype=jnp.int32)

    # block_rows=16 exercises the batch grid (3 tiles) and the ragged last
    # tile (40 % 16 != 0) with row masking; production default is 512.
    loss = label_smoothing_loss(pred, target, num_classes=C,
                                smoothing=smoothing, block_rows=16)
    loss = jax.block_until_ready(loss)

    ref = _reference_loss(pred, target, num_classes=C, smoothing=smoothing)
    assert jnp.allclose(loss, ref, atol=1e-5, rtol=1e-5), (loss, ref)

    print("KERNEL_OK")
</pallas_src>

<mosaic_0001>
module attributes {stable_mosaic.version = 11 : i64} {
  func.func @_label_smoothing_kernel(%arg0: i32, %arg1: memref<16x128xf32, #tpu.memory_space<vmem>>, %arg2: memref<16x1xi32, #tpu.memory_space<vmem>>, %arg3: memref<1x128xf32, #tpu.memory_space<vmem>>) attributes {dimension_semantics = [#tpu.dimension_semantics<parallel>], iteration_bounds = array<i64: 3>, scalar_prefetch = 0 : i64, scratch_operands = 0 : i64, tpu.core_type = #tpu.core_type<tc>, window_params = [{transform_indices = @transform_0, window_bounds = array<i64: 16, 128>}, {transform_indices = @transform_1, window_bounds = array<i64: 16, 1>}, {transform_indices = @transform_2, window_bounds = array<i64: 1, 128>}]} {
    %c0 = arith.constant 0 : index
    %c0_0 = arith.constant 0 : index
    %0 = vector.load %arg1[%c0, %c0_0] : memref<16x128xf32, #tpu.memory_space<vmem>>, vector<16x128xf32>
    %c0_1 = arith.constant 0 : index
    %c0_2 = arith.constant 0 : index
    %1 = vector.load %arg2[%c0_1, %c0_2] : memref<16x1xi32, #tpu.memory_space<vmem>>, vector<16x1xi32>
    %cst = arith.constant dense<0xFF800000> : vector<16xf32>
    %2 = vector.multi_reduction <maximumf>, %0, %cst [1] : vector<16x128xf32> to vector<16xf32>
    %3 = vector.shape_cast %2 : vector<16xf32> to vector<16x1xf32>
    %4 = vector.broadcast %3 : vector<16x1xf32> to vector<16x128xf32>
    %5 = arith.subf %0, %4 : vector<16x128xf32>
    %6 = math.exp %5 : vector<16x128xf32>
    %cst_3 = arith.constant dense<0.000000e+00> : vector<16xf32>
    %7 = vector.multi_reduction <add>, %6, %cst_3 [1] : vector<16x128xf32> to vector<16xf32>
    %8 = vector.shape_cast %7 : vector<16xf32> to vector<16x1xf32>
    %9 = math.log %8 : vector<16x1xf32>
    %10 = tpu.iota {dimensions = array<i32: 1>} : vector<16x128xi32>
    %cst_4 = arith.constant dense<0.000000e+00> : vector<16xf32>
    %11 = vector.multi_reduction <add>, %5, %cst_4 [1] : vector<16x128xf32> to vector<16xf32>
    %12 = vector.shape_cast %11 : vector<16xf32> to vector<16x1xf32>
    %13 = vector.broadcast %1 : vector<16x1xi32> to vector<16x128xi32>
    %14 = arith.cmpi eq, %10, %13 : vector<16x128xi32>
    %cst_5 = arith.constant 0.000000e+00 : f32
    %15 = vector.broadcast %cst_5 : f32 to vector<16x128xf32>
    %16 = arith.select %14, %5, %15 : vector<16x128xi1>, vector<16x128xf32>
    %cst_6 = arith.constant dense<0.000000e+00> : vector<16xf32>
    %17 = vector.multi_reduction <add>, %16, %cst_6 [1] : vector<16x128xf32> to vector<16xf32>
    %18 = vector.shape_cast %17 : vector<16xf32> to vector<16x1xf32>
    %cst_7 = arith.constant 1.280000e+02 : f32
    %19 = vector.broadcast %cst_7 : f32 to vector<16x1xf32>
    %20 = arith.mulf %19, %9 : vector<16x1xf32>
    %21 = arith.subf %12, %20 : vector<16x1xf32>
    %22 = arith.subf %18, %9 : vector<16x1xf32>
    %cst_8 = arith.constant 0.000000e+00 : f32
    %cst_9 = arith.constant 0.00393700786 : f32
    %23 = arith.subf %cst_8, %cst_9 : f32
    %24 = vector.broadcast %23 : f32 to vector<16x1xf32>
    %25 = arith.mulf %24, %21 : vector<16x1xf32>
    %cst_10 = arith.constant 4.960630e-01 : f32
    %26 = vector.broadcast %cst_10 : f32 to vector<16x1xf32>
    %27 = arith.mulf %26, %22 : vector<16x1xf32>
    %28 = arith.subf %25, %27 : vector<16x1xf32>
    %29 = tpu.iota {dimensions = array<i32: 0>} : vector<16x1xi32>
    %c16_i32 = arith.constant 16 : i32
    %30 = arith.muli %arg0, %c16_i32 : i32
    %31 = vector.broadcast %30 : i32 to vector<16x1xi32>
    %32 = arith.addi %29, %31 : vector<16x1xi32>
    %c40_i32 = arith.constant 40 : i32
    %33 = vector.broadcast %c40_i32 : i32 to vector<16x1xi32>
    %34 = arith.cmpi slt, %32, %33 : vector<16x1xi32>
    %cst_11 = arith.constant 0.000000e+00 : f32
    %35 = vector.broadcast %cst_11 : f32 to vector<16x1xf32>
    %36 = arith.select %34, %28, %35 : vector<16x1xi1>, vector<16x1xf32>
    %37 = vector.shape_cast %36 : vector<16x1xf32> to vector<1x16x1xf32>
    %cst_12 = arith.constant dense<0.000000e+00> : vector<1xf32>
    %38 = vector.multi_reduction <add>, %37, %cst_12 [1, 2] : vector<1x16x1xf32> to vector<1xf32>
    %39 = vector.shape_cast %38 : vector<1xf32> to vector<1x1x1xf32>
    %40 = vector.extract %39[0, 0, 0] : f32 from vector<1x1x1xf32>
    %41 = vector.broadcast %40 : f32 to vector<1x128xf32>
    %c0_13 = arith.constant 0 : index
    %c0_14 = arith.constant 0 : index
    %42 = vector.load %arg3[%c0_13, %c0_14] : memref<1x128xf32, #tpu.memory_space<vmem>>, vector<1x128xf32>
    tpu.vector_store %arg3[%c0_13, %c0_14], %41 {strides = array<i32>} : memref<1x128xf32, #tpu.memory_space<vmem>>, vector<1x128xf32>,
    return
  }
  func.func @transform_0(%arg0: i32) -> (i32, i32) {
    %c0_i32 = arith.constant 0 : i32
    %c0_i32_0 = arith.constant 0 : i32
    return %arg0, %c0_i32 : i32, i32
  }
  func.func @transform_1(%arg0: i32) -> (i32, i32) {
    %c0_i32 = arith.constant 0 : i32
    %c0_i32_0 = arith.constant 0 : i32
    return %arg0, %c0_i32 : i32, i32
  }
  func.func @transform_2(%arg0: i32) -> (i32, i32) {
    %c0_i32 = arith.constant 0 : i32
    %c0_i32_0 = arith.constant 0 : i32
    return %c0_i32, %arg0 : i32, i32
  }
}

</mosaic_0001>

<llo_original>
// kernel: tpu_custom_call.1
$region0: #{tpu_custom_call.1}
  #allocation0 [shape = 'u32[]', space=smem, size = 0x4, offset = 0x4, fixed_abs, tag = 'smem constant byte address 0x4 - core index']
  #allocation1 [shape = 'u32[144,128]{1,0:T(1,128)}', space=vmem, size = 0x12000, scoped, tag = 'internal scratch']
  %s0 = inlined_call_operand.vmem [shape: f32[40,128], index: 0, kind: input, shape index: {}]
  %s1 = inlined_call_operand.vmem [shape: s32[40,1], index: 1, kind: input, shape index: {}]
  %s2 = inlined_call_operand.hbm [shape: f32[1,384], index: 2, kind: output, shape index: {}]
  %s3 = sld [smem:[#allocation0]]
  $region41: #{tpu_custom_call.1} parent=0
    _
  %s5 = ssub.s32 1, %s3
  %s6 = scalar_select 0, %s5, %s3
  $region1: #{tpu_custom_call.1} parent=0
    #allocation2 [shape = 'u8[1024]{0}', space=vmem, size = 0x400, scoped, tag = 'output window, operand 0']
    #allocation3 [shape = 's32[2]{0}', space=sflag, size = 0x8, scoped, tag = 'scoped memory for tpu_custom_call.1']
    %7 = vsyncpa [#allocation3], 0
    %s8 = scalar_lea.sflag [#allocation3], 1
    %9 = vsyncpa %s8, 0
    loop: start=0, step=1, limit=5
    $region2: #{tpu_custom_call.1} parent=1 // loop_pre_header
      _
    $region3: #{tpu_custom_call.1} parent=1 // loop_header
      %s11 = sphi 0, %s15
      %p12 = scmp.ge.s32.totalorder %s11, 5
      %s21 = sphi 0, %s23
      %s24 = sphi 0, %s21
      %s25 = sphi 0, %s24
      %s41 = sphi 0, %s25
      %s47 = sphi 0, %s49
      %s50 = sphi 0, %s47
      %s51 = sphi 0, %s50
      %s67 = sphi 0, %s51
      %s73 = sphi 0, %s75
      %s76 = sphi 0, %s73
      %s77 = sphi 0, %s76
      %s93 = sphi 0, %s77
    $region4: #{tpu_custom_call.1} parent=1 // loop_header_branch
      %14 = sbr.rel (%p12) target = $region8
    $region5: #{tpu_custom_call.1} parent=1 // loop_body
      %s16 = ssub.s32 %s11, 1
      %s17 = ssub.s32 %s11, 2
      %s18 = sadd.s32 %s11, 1
      %s19 = ssub.s32 %s11, %s18
      %p20 = scmp.eq.s32.totalorder %s19, 0
      %s22 = sadd.s32 %s21, 1
      %s23 = scalar_select %p20, %s21, %s22
      %p26 = pneg %p20
      %p27 = scmp.eq.s32.totalorder %s11, 2
      %p28 = por %p26, %p27
      %p29 = scmp.ne.s32.totalorder %s21, %s24
      %p30 = scmp.eq.s32.totalorder %s11, 0
      %p31 = por %p29, %p30
      %p32 = scmp.ne.s32.totalorder %s21, %s24
      %p33 = scmp.eq.s32.totalorder %s16, 2
      %p34 = por %p32, %p33
      %p35 = scmp.ne.s32.totalorder %s24, %s25
      %p36 = scmp.eq.s32.totalorder %s16, 0
      %p37 = por %p35, %p36
      %p38 = scmp.ne.s32.totalorder %s24, %s25
      %p39 = scmp.eq.s32.totalorder %s17, 2
      %p40 = por %p38, %p39
      %p42 = scmp.ne.s32.totalorder %s25, %s41
      %p43 = scmp.eq.s32.totalorder %s17, 0
      %p44 = por %p42, %p43
      %s45 = ssub.s32 %s11, %s18
      %p46 = scmp.eq.s32.totalorder %s45, 0
      %s48 = sadd.s32 %s47, 1
      %s49 = scalar_select %p46, %s47, %s48
      %p52 = pneg %p46
      %p53 = scmp.eq.s32.totalorder %s11, 2
      %p54 = por %p52, %p53
      %p55 = scmp.ne.s32.totalorder %s47, %s50
      %p56 = scmp.eq.s32.totalorder %s11, 0
      %p57 = por %p55, %p56
      %p58 = scmp.ne.s32.totalorder %s47, %s50
      %p59 = scmp.eq.s32.totalorder %s16, 2
      %p60 = por %p58, %p59
      %p61 = scmp.ne.s32.totalorder %s50, %s51
      %p62 = scmp.eq.s32.totalorder %s16, 0
      %p63 = por %p61, %p62
      %p64 = scmp.ne.s32.totalorder %s50, %s51
      %p65 = scmp.eq.s32.totalorder %s17, 2
      %p66 = por %p64, %p65
      %p68 = scmp.ne.s32.totalorder %s51, %s67
      %p69 = scmp.eq.s32.totalorder %s17, 0
      %p70 = por %p68, %p69
      %s71 = ssub.s32 %s11, %s18
      %p72 = scmp.eq.s32.totalorder %s71, 0
      %s74 = sadd.s32 %s73, 1
      %s75 = scalar_select %p72, %s73, %s74
      %p78 = pneg %p72
      %p79 = scmp.eq.s32.totalorder %s11, 2
      %p80 = por %p78, %p79
      %p81 = scmp.ne.s32.totalorder %s73, %s76
      %p82 = scmp.eq.s32.totalorder %s11, 0
      %p83 = por %p81, %p82
      %p84 = scmp.ne.s32.totalorder %s73, %s76
      %p85 = scmp.eq.s32.totalorder %s16, 2
      %p86 = por %p84, %p85
      %p87 = scmp.ne.s32.totalorder %s76, %s77
      %p88 = scmp.eq.s32.totalorder %s16, 0
      %p89 = por %p87, %p88
      %p90 = scmp.ne.s32.totalorder %s76, %s77
      %p91 = scmp.eq.s32.totalorder %s17, 2
      %p92 = por %p90, %p91
      %p94 = scmp.ne.s32.totalorder %s77, %s93
      %p95 = scmp.eq.s32.totalorder %s17, 0
      %p96 = por %p94, %p95
      %p97 = scmp.le.s32.totalorder 1, %s11
      %p98 = scmp.lt.s32.totalorder %s11, 4
      %p99 = pnand %p97, %p98
      %p100 = pneg %p99
      // Predicated region
      $region9: #{tpu_custom_call.1} parent=5 // pred_check
        _
      $region10: #{tpu_custom_call.1} parent=5 // pred_check_branch
        %102 = sbr.rel (%p99) target = $region12
      $region11: #{tpu_custom_call.1} parent=5 // pred_region
        %s103 = ssub.s32 %s11, 1
      $region12: #{tpu_custom_call.1} parent=5 // pred_fallthru
        _
      %p104 = scmp.lt.s32.totalorder %s11, 3
      // Predicated region
      $region13: #{tpu_custom_call.1} parent=5 // pred_check
        %p105 = pneg %p104
      $region14: #{tpu_custom_call.1} parent=5 // pred_check_branch
        %107 = sbr.rel (%p105) target = $region16
      $region15: #{tpu_custom_call.1} parent=5 // pred_region
        // Predicated region
        $region17: #{tpu_custom_call.1} parent=15 // pred_check
          %p108 = pneg %p31
        $region18: #{tpu_custom_call.1} parent=15 // pred_check_branch
          %110 = sbr.rel (%p108) target = $region20
        $region19: #{tpu_custom_call.1} parent=15 // pred_region
          %s111 = smul.u32 2, %s11
          %s112 = ssub.s32 5, %s111
          %p113 = scmp.lt.s32.totalorder %s112, 2
          %s114 = scalar_select %p113, %s112, 2
          %s115 = smul.u32 128, %s114
          %p116 = scmp.lt.s32.totalorder %s111, 4
          %s117 = scalar_select %p116, %s111, 4
          %s118 = smul.addr %s117, 8
          %s119 = scalar_lea.vmem %s0, %s118
          %s120 = smul.u32 2, %s11
          %s121 = ssub.s32 5, %s120
          %p122 = scmp.lt.s32.totalorder %s121, 2
          %s123 = scalar_select %p122, %s121, 2
          %s124 = smul.u32 128, %s123
        $region20: #{tpu_custom_call.1} parent=15 // pred_fallthru
          _
        // Predicated region
        $region21: #{tpu_custom_call.1} parent=15 // pred_check
          %p125 = pneg %p57
        $region22: #{tpu_custom_call.1} parent=15 // pred_check_branch
          %127 = sbr.rel (%p125) target = $region24
        $region23: #{tpu_custom_call.1} parent=15 // pred_region
          %s128 = smul.u32 2, %s11
          %s129 = ssub.s32 5, %s128
          %p130 = scmp.lt.s32.totalorder %s129, 2
          %s131 = scalar_select %p130, %s129, 2
          %s132 = smul.u32 128, %s131
          %p133 = scmp.lt.s32.totalorder %s128, 4
          %s134 = scalar_select %p133, %s128, 4
          %s135 = smul.addr %s134, 8
          %s136 = scalar_lea.vmem %s1, %s135
          %s137 = smul.u32 2, %s11
          %s138 = ssub.s32 5, %s137
          %p139 = scmp.lt.s32.totalorder %s138, 2
          %s140 = scalar_select %p139, %s138, 2
          %s141 = smul.u32 128, %s140
        $region24: #{tpu_custom_call.1} parent=15 // pred_fallthru
          _
      $region16: #{tpu_custom_call.1} parent=5 // pred_fallthru
        _
      %p142 = scmp.le.s32.totalorder 1, %s11
      %p143 = scmp.lt.s32.totalorder %s11, 4
      %p144 = pnand %p142, %p143
      %p145 = pneg %p144
      // Predicated region
      $region25: #{tpu_custom_call.1} parent=5 // pred_check
        _
      $region26: #{tpu_custom_call.1} parent=5 // pred_check_branch
        %147 = sbr.rel (%p144) target = $region28
      $region27: #{tpu_custom_call.1} parent=5 // pred_region
        %s148 = ssub.s32 %s11, 1
        %s149 = smul.u32 2, %s16
        %s150 = ssub.s32 5, %s149
        %p151 = scmp.lt.s32.totalorder %s150, 2
        %s152 = scalar_select %p151, %s150, 2
        %s153 = smul.u32 128, %s152
        %p154 = scmp.lt.s32.totalorder %s149, 4
        %s155 = scalar_select %p154, %s149, 4
        %s156 = smul.addr %s155, 8
        %s157 = scalar_lea.vmem %s0, %s156
        %p158 = pneg %p37
        %p159 = pneg %p34
        %s160 = smul.u32 2, %s16
        %s161 = ssub.s32 5, %s160
        %p162 = scmp.lt.s32.totalorder %s161, 2
        %s163 = scalar_select %p162, %s161, 2
        %s164 = smul.u32 128, %s163
        %p165 = scmp.lt.s32.totalorder %s160, 4
        %s166 = scalar_select %p165, %s160, 4
        %s167 = smul.addr %s166, 8
        %s168 = scalar_lea.vmem %s1, %s167
        %p169 = pneg %p63
        %p170 = pneg %p60
        %p171 = pneg %p89
        %p172 = pneg %p86
        %s173 = sand.u32 %s76, 1
        %s174 = scalar_lea.sflag [#allocation3], %s173
        %s175 = sand.u32 %s76, 1
        %s176 = scalar_lea.vmem [#allocation2], %s175
        %s177 = smul.u32 2, %s16
        %s178 = ssub.s32 5, %s177
        %p179 = scmp.lt.s32.totalorder %s178, 2
        %s180 = scalar_select %p179, %s178, 2
        %s181 = smul.u32 128, %s180
        %p182 = scmp.lt.s32.totalorder %s177, 4
        %s183 = scalar_select %p182, %s177, 4
        %s184 = smul.addr %s183, 8
        %s185 = scalar_lea.vmem %s0, %s184
        %s186 = smul.u32 2, %s16
        %s187 = ssub.s32 5, %s186
        %p188 = scmp.lt.s32.totalorder %s187, 2
        %s189 = scalar_select %p188, %s187, 2
        %s190 = smul.u32 128, %s189
        %s191 = smul.u32 2, %s16
        %s192 = ssub.s32 5, %s191
        %p193 = scmp.lt.s32.totalorder %s192, 2
        %s194 = scalar_select %p193, %s192, 2
        %s195 = smul.u32 128, %s194
        %p196 = scmp.lt.s32.totalorder %s191, 4
        %s197 = scalar_select %p196, %s191, 4
        %s198 = smul.addr %s197, 8
        %s199 = scalar_lea.vmem %s1, %s198
        %s200 = smul.u32 2, %s16
        %s201 = ssub.s32 5, %s200
        %p202 = scmp.lt.s32.totalorder %s201, 2
        %s203 = scalar_select %p202, %s201, 2
        %s204 = smul.u32 128, %s203
        %v205 = vld [vmem:[%s185] sm:$0xff]
        %v206 = vld [vmem:[%s185 + $0x8] sm:$0xff]
        %v207 = vld [vmem:[%s199] sm:$0xff]
        %v208 = vld [vmem:[%s199 + $0x8] sm:$0xff]
        %209 = vmax.xlane.f32.xlu0 %v205
        %v210 = vpop.xlane.xlu0 %209
        %211 = vmax.xlane.f32.xlu0 %v206
        %v212 = vpop.xlane.xlu0 %211
        %v213 = vsub.f32 %v205, %v210
        %v214 = vsub.f32 %v206, %v212
        %v215 = vmul.f32 %v213, 1.442695
        %v216 = vpow.pop %v215
        %v217 = vmul.f32 %v214, 1.442695
        %v218 = vpow.pop %v217
        %219 = vadd.xlane.f32.xlu0 %v216
        %v220 = vpop.xlane.xlu0 %219
        %221 = vadd.xlane.f32.xlu0 %v218
        %v222 = vpop.xlane.xlu0 %221
        %v223 = vlog2.pop %v220
        %v224 = vmul.f32 %v223, 0.6931472
        %v225 = vlog2.pop %v222
        %v226 = vmul.f32 %v225, 0.6931472
        %v227 = vlaneseq
        %v228 = vand.u32 %v227, 127
        %229 = vadd.xlane.f32.xlu0 %v213
        %v230 = vpop.xlane.xlu0 %229
        %231 = vadd.xlane.f32.xlu0 %v214
        %v232 = vpop.xlane.xlu0 %231
        %233 = vset.pattern.permute.xlu0 0
        %234 = vperm.xlu0 %233, %v207
        %v235 = vpop.permute.xlu0 %234
        %236 = vset.pattern.permute.xlu0 0
        %237 = vperm.xlu0 %236, %v208
        %v238 = vpop.permute.xlu0 %237
        %vm239 = vcmp.eq.s32.totalorder %v228, %v235
        %vm240 = vcmp.eq.s32.totalorder %v228, %v238
        %v241 = vsel %vm239, %v213, 0.0
        %v242 = vsel %vm240, %v214, 0.0
        %243 = vadd.xlane.f32.xlu0 %v241
        %v244 = vpop.xlane.xlu0 %243
        %245 = vadd.xlane.f32.xlu0 %v242
        %v246 = vpop.xlane.xlu0 %245
        %v247 = vmul.f32 %v224, 128.0
        %v248 = vmul.f32 %v226, 128.0
        %v249 = vsub.f32 %v230, %v247
        %v250 = vsub.f32 %v232, %v248
        %v251 = vsub.f32 %v244, %v224
        %v252 = vsub.f32 %v246, %v226
        %v253 = vmul.f32 %v249, -0.003937008
        %v254 = vmul.f32 %v250, -0.003937008
        %v255 = vmul.f32 %v251, 0.496063
        %v256 = vmul.f32 %v252, 0.496063
        %v257 = vsub.f32 %v253, %v255
        %v258 = vsub.f32 %v254, %v256
        %v259 = vlaneseq
        %v260 = vshrl.u32 %v259, 7
        %v261 = vadd.s32 %v260, 8
        %s262 = smul.u32 %s16, 16
        %v263 = vstv %s262
        %v264 = vadd.s32 %v260, %v263
        %v265 = vadd.s32 %v261, %v263
        %vm266 = vcmp.lt.s32.totalorder %v264, 40
        %vm267 = vcmp.lt.s32.totalorder %v265, 40
        %v268 = vsel %vm266, %v257, 0.0
        %v269 = vsel %vm267, %v258, 0.0
        %vm270 = vcmask 7168
        %v271 = vsel %vm270, %v268, 0.0
        %v272 = vsel %vm270, %v269, 0.0
        %v273 = vadd.f32 %v271, %v272
        %274 = vadd.xlane.f32.xlu0 %v273
        %v275 = vpop.xlane.xlu0 %274
        %v276 = vrot.slane %v275, 4
        %v277 = vadd.f32 %v275, %v276
        %v278 = vrot.slane %v277, 2
        %v279 = vadd.f32 %v277, %v278
        %v280 = vrot.slane %v279, 1
        %v281 = vadd.f32 %v279, %v280
        %s282 = vtos %v281
        %v283 = vstv %s282
        %284 = vst [vmem:[%s176] sm:$0x1] %v283
        %s285 = sand.u32 %s76, 1
        %s286 = scalar_lea.sflag [#allocation3], %s285
        %s287 = sand.u32 %s76, 1
        %s288 = scalar_lea.vmem [#allocation2], %s287
        // Predicated region
        $region29: #{tpu_custom_call.1} parent=27 // pred_check
          %p289 = pneg %p86
        $region30: #{tpu_custom_call.1} parent=27 // pred_check_branch
          %291 = sbr.rel (%p289) target = $region32
        $region31: #{tpu_custom_call.1} parent=27 // pred_region
          %s293 = ssub.s32 16, 16
          %294 = vsyncadd %s286, %s293
          %s295 = smul.addr %s16, 16
          %s296 = scalar_lea.hbm %s2, %s295
          %s298 = sshll.u32 %s288, 4
          %s299 = int_to_ptr.vmem [resolvable:$true] %s298
          %301 = dma.vmem_to_hbm [thread:$0]  %s299, 16, %s296, %s286
        $region32: #{tpu_custom_call.1} parent=27 // pred_fallthru
          _
      $region28: #{tpu_custom_call.1} parent=5 // pred_fallthru
        _
      %p302 = scmp.le.s32.totalorder 2, %s11
      // Predicated region
      $region33: #{tpu_custom_call.1} parent=5 // pred_check
        %p303 = pneg %p302
      $region34: #{tpu_custom_call.1} parent=5 // pred_check_branch
        %305 = sbr.rel (%p303) target = $region36
      $region35: #{tpu_custom_call.1} parent=5 // pred_region
        %s306 = ssub.s32 %s11, 2
        // Predicated region
        $region37: #{tpu_custom_call.1} parent=35 // pred_check
          %p307 = pneg %p92
        $region38: #{tpu_custom_call.1} parent=35 // pred_check_branch
          %309 = sbr.rel (%p307) target = $region40
        $region39: #{tpu_custom_call.1} parent=35 // pred_region
          %s310 = sand.u32 %s77, 1
          %s311 = scalar_lea.sflag [#allocation3], %s310
          %s312 = sand.u32 %s77, 1
          %s313 = scalar_lea.vmem [#allocation2], %s312
          %314 = dma.done %s311, 16
        $region40: #{tpu_custom_call.1} parent=35 // pred_fallthru
          _
      $region36: #{tpu_custom_call.1} parent=5 // pred_fallthru
        _
    $region6: #{tpu_custom_call.1} parent=1 // loop_footer
      %s15 = sadd.s32 1, %s11
    $region7: #{tpu_custom_call.1} parent=1 // loop_footer_branch
      %10 = sbr.rel target = $region3
    $region8: #{tpu_custom_call.1} parent=1 // loop_exit
      _
    %315 = vsyncpa [#allocation3], 1
    %s316 = scalar_lea.sflag [#allocation3], 1
    %317 = vsyncpa %s316, 1

</llo_original>
